<compile_context>
chip_gen: v7x
topology: tpu7x:2x2x1
jax: 0.10.0
libtpu: 0.0.40
codegen_flags: <defaults>
</compile_context>

<pallas_src>
import jax
import jax.numpy as jnp
from jax.experimental import pallas as pl
from jax.experimental.pallas import tpu as pltpu

H_PAD = 128  # hidden dim 100 zero-padded up to one full lane width


def mlp_kernel(x_ref, w1_ref, b1_ref, w2_ref, b2_ref, w3_ref, b3_ref, o_ref):
    x = x_ref[...]                                                 # (TB, 1) f32
    # Layer 1 (in=1): K=1 contraction -> VPU broadcast multiply, no MXU push.
    h1 = jnp.maximum(x * w1_ref[...] + b1_ref[...], 0.0)          # (TB, 128)
    # Layer 2: the only real matmul -> full-tile MXU, f32 accumulate.
    h2 = jnp.dot(h1, w2_ref[...], preferred_element_type=jnp.float32) + b2_ref[...]
    h2 = jnp.maximum(h2, 0.0)                                      # (TB, 128)
    # Layer 3 (out=1): N=1 -> VPU multiply + XLU cross-lane reduce, no MXU.
    y = jnp.sum(h2 * w3_ref[...], axis=-1, keepdims=True) + b3_ref[...]  # (TB, 1)
    # Lane-dense unmasked store: broadcast across 128 lanes; wrapper slices col 0.
    o_ref[...] = jnp.broadcast_to(y, o_ref.shape).astype(o_ref.dtype)


def _round_up(n, m):
    return (n + m - 1) // m * m


def neural_network_forward(x, params, *, tb=256):
    """x: (B, ...) flattened to (B, 1); returns (B, 1). Matches the PyTorch module."""
    w1, b1, w2, b2, w3, b3 = params
    B = x.shape[0]
    x2d = x.reshape(B, -1).astype(jnp.float32)                     # nn.Flatten
    assert x2d.shape[1] == w1.shape[0] == 1, "module expects 1 flattened feature"

    h_in, h_hid = w2.shape                                         # (100, 100)
    # Zero-pad hidden dim to 128; present w1 / w3 as (1,128) rows for the
    # VPU-only layers. Padded bias lanes are zero -> ReLU keeps them inert;
    # padded w3 lanes are zero -> they don't contribute to the reduce.
    w1p = jnp.pad(w1, ((0, 0), (0, H_PAD - h_hid)))                # (1, 128)
    b1p = jnp.pad(b1, ((0, 0), (0, H_PAD - h_hid)))                # (1, 128)
    w2p = jnp.pad(w2, ((0, H_PAD - h_in), (0, H_PAD - h_hid)))     # (128, 128)
    b2p = jnp.pad(b2, ((0, 0), (0, H_PAD - h_hid)))                # (1, 128)
    w3p = jnp.pad(w3.T, ((0, 0), (0, H_PAD - h_in)))               # (1, 128)
    b3p = b3.reshape(1, 1)                                         # (1, 1)

    # Batch grid: TB rows per step, batch padded to a multiple of TB.
    tb_eff = min(_round_up(tb, 8), _round_up(B, 8))
    pB = _round_up(B, tb_eff)
    x_pad = jnp.pad(x2d, ((0, pB - B), (0, 0)))
    grid = (pB // tb_eff,)

    cost = pl.CostEstimate(
        flops=2 * pB * H_PAD * H_PAD + 6 * pB * H_PAD,
        transcendentals=0,
        bytes_accessed=4 * (pB * 1 + pB * H_PAD + H_PAD * H_PAD + 4 * H_PAD + 1),
    )

    out_pad = pl.pallas_call(
        mlp_kernel,
        out_shape=jax.ShapeDtypeStruct((pB, H_PAD), jnp.float32),
        grid=grid,
        in_specs=[
            pl.BlockSpec((tb_eff, 1), lambda i: (i, 0)),           # x batch tile
            pl.BlockSpec((1, H_PAD), lambda i: (0, 0)),            # w1 row (resident)
            pl.BlockSpec((1, H_PAD), lambda i: (0, 0)),            # b1
            pl.BlockSpec((H_PAD, H_PAD), lambda i: (0, 0)),        # w2
            pl.BlockSpec((1, H_PAD), lambda i: (0, 0)),            # b2
            pl.BlockSpec((1, H_PAD), lambda i: (0, 0)),            # w3 row
            pl.BlockSpec((1, 1), lambda i: (0, 0)),                # b3
        ],
        out_specs=pl.BlockSpec((tb_eff, H_PAD), lambda i: (i, 0)),
        compiler_params=pltpu.CompilerParams(
            dimension_semantics=("parallel",)),
        cost_estimate=cost,
    )(x_pad, w1p, b1p, w2p, b2p, w3p, b3p)

    return out_pad[:B, :1]                                         # (B, 1)


def init_params(key):
    """PyTorch-default-style init: U(-1/sqrt(fan_in), 1/sqrt(fan_in)).
    Weights stored as (in, out); biases as (1, out)."""
    def linear(key, fan_in, fan_out):
        kw, kb = jax.random.split(key)
        bound = 1.0 / jnp.sqrt(jnp.float32(fan_in))
        w = jax.random.uniform(kw, (fan_in, fan_out), jnp.float32, -bound, bound)
        b = jax.random.uniform(kb, (1, fan_out), jnp.float32, -bound, bound)
        return w, b

    k1, k2, k3 = jax.random.split(key, 3)
    w1, b1 = linear(k1, 1, 100)
    w2, b2 = linear(k2, 100, 100)
    w3, b3 = linear(k3, 100, 1)
    return (w1, b1, w2, b2, w3, b3)


if __name__ == "__main__":
    key = jax.random.PRNGKey(0)
    kp, kx = jax.random.split(key)

    params = init_params(kp)
    # Flatten -> Linear(1, ...) implies one scalar feature per example.
    # Small batch of 16 with tb=8 exercises a 2-step batch grid.
    x = jax.random.normal(kx, (16, 1, 1), jnp.float32)

    out = neural_network_forward(x, params, tb=8)
    jax.block_until_ready(out)

    # Sanity check against plain-JAX reference.
    w1, b1, w2, b2, w3, b3 = params
    xf = x.reshape(x.shape[0], -1)
    h1 = jnp.maximum(xf @ w1 + b1, 0.0)
    h2 = jnp.maximum(h1 @ w2 + b2, 0.0)
    ref = h2 @ w3 + b3
    assert out.shape == (16, 1)
    assert jnp.allclose(out, ref, atol=1e-5, rtol=1e-5)

    print("KERNEL_OK")
</pallas_src>

<mosaic_0001>
module attributes {stable_mosaic.version = 11 : i64} {
  func.func @mlp_kernel(%arg0: i32, %arg1: memref<8x1xf32, #tpu.memory_space<vmem>>, %arg2: memref<1x128xf32, #tpu.memory_space<vmem>>, %arg3: memref<1x128xf32, #tpu.memory_space<vmem>>, %arg4: memref<128x128xf32, #tpu.memory_space<vmem>>, %arg5: memref<1x128xf32, #tpu.memory_space<vmem>>, %arg6: memref<1x128xf32, #tpu.memory_space<vmem>>, %arg7: memref<1x1xf32, #tpu.memory_space<vmem>>, %arg8: memref<8x128xf32, #tpu.memory_space<vmem>>) attributes {dimension_semantics = [#tpu.dimension_semantics<parallel>], iteration_bounds = array<i64: 2>, scalar_prefetch = 0 : i64, scratch_operands = 0 : i64, tpu.core_type = #tpu.core_type<tc>, window_params = [{transform_indices = @transform_0, window_bounds = array<i64: 8, 1>}, {pipeline_mode = #tpu.pipeline_mode<synchronous>, transform_indices = @transform_1, window_bounds = array<i64: 1, 128>}, {pipeline_mode = #tpu.pipeline_mode<synchronous>, transform_indices = @transform_2, window_bounds = array<i64: 1, 128>}, {pipeline_mode = #tpu.pipeline_mode<synchronous>, transform_indices = @transform_3, window_bounds = array<i64: 128, 128>}, {pipeline_mode = #tpu.pipeline_mode<synchronous>, transform_indices = @transform_4, window_bounds = array<i64: 1, 128>}, {pipeline_mode = #tpu.pipeline_mode<synchronous>, transform_indices = @transform_5, window_bounds = array<i64: 1, 128>}, {pipeline_mode = #tpu.pipeline_mode<synchronous>, transform_indices = @transform_6, window_bounds = array<i64: 1, 1>}, {transform_indices = @transform_7, window_bounds = array<i64: 8, 128>}]} {
    %c0 = arith.constant 0 : index
    %c0_0 = arith.constant 0 : index
    %0 = vector.load %arg1[%c0, %c0_0] : memref<8x1xf32, #tpu.memory_space<vmem>>, vector<8x1xf32>
    %c0_1 = arith.constant 0 : index
    %c0_2 = arith.constant 0 : index
    %1 = vector.load %arg2[%c0_1, %c0_2] : memref<1x128xf32, #tpu.memory_space<vmem>>, vector<1x128xf32>
    %2 = vector.broadcast %0 : vector<8x1xf32> to vector<8x128xf32>
    %3 = vector.broadcast %1 : vector<1x128xf32> to vector<8x128xf32>
    %4 = arith.mulf %2, %3 : vector<8x128xf32>
    %c0_3 = arith.constant 0 : index
    %c0_4 = arith.constant 0 : index
    %5 = vector.load %arg3[%c0_3, %c0_4] : memref<1x128xf32, #tpu.memory_space<vmem>>, vector<1x128xf32>
    %6 = vector.broadcast %5 : vector<1x128xf32> to vector<8x128xf32>
    %7 = arith.addf %4, %6 : vector<8x128xf32>
    %cst = arith.constant 0.000000e+00 : f32
    %8 = vector.broadcast %cst : f32 to vector<8x128xf32>
    %9 = arith.maximumf %7, %8 : vector<8x128xf32>
    %c0_5 = arith.constant 0 : index
    %c0_6 = arith.constant 0 : index
    %10 = vector.load %arg4[%c0_5, %c0_6] : memref<128x128xf32, #tpu.memory_space<vmem>>, vector<128x128xf32>
    %cst_7 = arith.constant dense<0.000000e+00> : vector<8x128xf32>
    %11 = tpu.matmul %9, %10, %cst_7 {dimension_numbers = #tpu.dot_dimension_numbers<[1], [0], [0], [1], [0, 0, 1, 1], [], []>} : vector<8x128xf32>, vector<128x128xf32>, vector<8x128xf32> -> vector<8x128xf32>
    %c0_8 = arith.constant 0 : index
    %c0_9 = arith.constant 0 : index
    %12 = vector.load %arg5[%c0_8, %c0_9] : memref<1x128xf32, #tpu.memory_space<vmem>>, vector<1x128xf32>
    %13 = vector.broadcast %12 : vector<1x128xf32> to vector<8x128xf32>
    %14 = arith.addf %11, %13 : vector<8x128xf32>
    %cst_10 = arith.constant 0.000000e+00 : f32
    %15 = vector.broadcast %cst_10 : f32 to vector<8x128xf32>
    %16 = arith.maximumf %14, %15 : vector<8x128xf32>
    %c0_11 = arith.constant 0 : index
    %c0_12 = arith.constant 0 : index
    %17 = vector.load %arg6[%c0_11, %c0_12] : memref<1x128xf32, #tpu.memory_space<vmem>>, vector<1x128xf32>
    %18 = vector.broadcast %17 : vector<1x128xf32> to vector<8x128xf32>
    %19 = arith.mulf %16, %18 : vector<8x128xf32>
    %cst_13 = arith.constant dense<0.000000e+00> : vector<8xf32>
    %20 = vector.multi_reduction <add>, %19, %cst_13 [1] : vector<8x128xf32> to vector<8xf32>
    %21 = vector.shape_cast %20 : vector<8xf32> to vector<8x1xf32>
    %c0_14 = arith.constant 0 : index
    %c0_15 = arith.constant 0 : index
    %22 = vector.load %arg7[%c0_14, %c0_15] : memref<1x1xf32, #tpu.memory_space<vmem>>, vector<1x1xf32>
    %23 = vector.broadcast %22 : vector<1x1xf32> to vector<8x1xf32>
    %24 = arith.addf %21, %23 : vector<8x1xf32>
    %25 = vector.shape_cast %24 : vector<8x1xf32> to vector<8x1xf32>
    %26 = vector.broadcast %25 : vector<8x1xf32> to vector<8x128xf32>
    %c0_16 = arith.constant 0 : index
    %c0_17 = arith.constant 0 : index
    %27 = vector.load %arg8[%c0_16, %c0_17] : memref<8x128xf32, #tpu.memory_space<vmem>>, vector<8x128xf32>
    tpu.vector_store %arg8[%c0_16, %c0_17], %26 {strides = array<i32>} : memref<8x128xf32, #tpu.memory_space<vmem>>, vector<8x128xf32>,
    return
  }
  func.func @transform_0(%arg0: i32) -> (i32, i32) {
    %c0_i32 = arith.constant 0 : i32
    %c0_i32_0 = arith.constant 0 : i32
    return %arg0, %c0_i32 : i32, i32
  }
  func.func @transform_1(%arg0: i32) -> (i32, i32) {
    %c0_i32 = arith.constant 0 : i32
    %c0_i32_0 = arith.constant 0 : i32
    %c0_i32_1 = arith.constant 0 : i32
    return %c0_i32, %c0_i32_0 : i32, i32
  }
  func.func @transform_2(%arg0: i32) -> (i32, i32) {
    %c0_i32 = arith.constant 0 : i32
    %c0_i32_0 = arith.constant 0 : i32
    %c0_i32_1 = arith.constant 0 : i32
    return %c0_i32, %c0_i32_0 : i32, i32
  }
  func.func @transform_3(%arg0: i32) -> (i32, i32) {
    %c0_i32 = arith.constant 0 : i32
    %c0_i32_0 = arith.constant 0 : i32
    %c0_i32_1 = arith.constant 0 : i32
    return %c0_i32, %c0_i32_0 : i32, i32
  }
  func.func @transform_4(%arg0: i32) -> (i32, i32) {
    %c0_i32 = arith.constant 0 : i32
    %c0_i32_0 = arith.constant 0 : i32
    %c0_i32_1 = arith.constant 0 : i32
    return %c0_i32, %c0_i32_0 : i32, i32
  }
  func.func @transform_5(%arg0: i32) -> (i32, i32) {
    %c0_i32 = arith.constant 0 : i32
    %c0_i32_0 = arith.constant 0 : i32
    %c0_i32_1 = arith.constant 0 : i32
    return %c0_i32, %c0_i32_0 : i32, i32
  }
  func.func @transform_6(%arg0: i32) -> (i32, i32) {
    %c0_i32 = arith.constant 0 : i32
    %c0_i32_0 = arith.constant 0 : i32
    %c0_i32_1 = arith.constant 0 : i32
    return %c0_i32, %c0_i32_0 : i32, i32
  }
  func.func @transform_7(%arg0: i32) -> (i32, i32) {
    %c0_i32 = arith.constant 0 : i32
    %c0_i32_0 = arith.constant 0 : i32
    return %arg0, %c0_i32 : i32, i32
  }
}

</mosaic_0001>

<llo_original>
// kernel: tpu_custom_call.1
$region0: #{tpu_custom_call.1}
  #allocation0 [shape = 'u32[]', space=smem, size = 0x4, offset = 0x4, fixed_abs, tag = 'smem constant byte address 0x4 - core index']
  #allocation1 [shape = 'u32[144,128]{1,0:T(1,128)}', space=vmem, size = 0x12000, scoped, tag = 'internal scratch']
  #allocation2 [shape = 'f32[1,1]{1,0:T(1,128)S(1)}', space=vmem, size = 0x200, scoped, tag = 'scoped memory for tpu_custom_call.1']
  %s0 = inlined_call_operand.vmem [shape: f32[16,1], index: 0, kind: input, shape index: {}]
  %s1 = inlined_call_operand.vmem [shape: f32[1,128], index: 1, kind: input, shape index: {}]
  %s2 = inlined_call_operand.vmem [shape: f32[1,128], index: 2, kind: input, shape index: {}]
  %s3 = inlined_call_operand.hbm [shape: f32[128,128], index: 3, kind: input, shape index: {}]
  %s4 = inlined_call_operand.vmem [shape: f32[1,128], index: 4, kind: input, shape index: {}]
  %s5 = inlined_call_operand.vmem [shape: f32[1,128], index: 5, kind: input, shape index: {}]
  %s6 = inlined_call_operand.<no memory space> [shape: f32[1,1], index: 6, kind: input, shape index: {}]
  %s7 = inlined_call_operand.hbm [shape: f32[16,128], index: 7, kind: output, shape index: {}]
  %s8 = sld [smem:[#allocation0]]
  $region65: #{tpu_custom_call.1} parent=0
    _
  %s10 = ssub.s32 1, %s8
  %s11 = scalar_select 0, %s10, %s8
  %v12 = vstv %s6
  %13 = vst [vmem:[#allocation2] sm:$0x1] %v12
  $region1: #{tpu_custom_call.1} parent=0
    #allocation3 [shape = 'u8[65536]{0}', space=vmem, size = 0x10000, scoped, tag = 'input window, operand 3, single buffered']
    #allocation4 [shape = 's32[2]{0}', space=sflag, size = 0x8, scoped, tag = 'scoped memory for tpu_custom_call.1']
    #allocation5 [shape = 's32[2]{0}', space=sflag, size = 0x8, scoped, tag = 'scoped memory for tpu_custom_call.1']
    #allocation6 [shape = 'u8[8192]{0}', space=vmem, size = 0x2000, scoped, tag = 'output window, operand 0']
    %14 = vsyncpa [#allocation4], 0
    %15 = vsyncpa [#allocation5], 0
    %s16 = scalar_lea.sflag [#allocation5], 1
    %17 = vsyncpa %s16, 0
    loop: start=0, step=1, limit=4
    $region2: #{tpu_custom_call.1} parent=1 // loop_pre_header
      _
    $region3: #{tpu_custom_call.1} parent=1 // loop_header
      %s19 = sphi 0, %s23
      %p20 = scmp.ge.s32.totalorder %s19, 4
      %s29 = sphi 0, %s31
      %s32 = sphi 0, %s29
      %s33 = sphi 0, %s32
      %s49 = sphi 0, %s33
      %s53 = sphi 0, %s53
      %s55 = sphi 0, %s53
      %s56 = sphi 0, %s55
      %s70 = sphi 0, %s56
      %s74 = sphi 0, %s74
      %s76 = sphi 0, %s74
      %s77 = sphi 0, %s76
      %s91 = sphi 0, %s77
      %s95 = sphi 0, %s95
      %s97 = sphi 0, %s95
      %s98 = sphi 0, %s97
      %s112 = sphi 0, %s98
      %s116 = sphi 0, %s116
      %s118 = sphi 0, %s116
      %s119 = sphi 0, %s118
      %s133 = sphi 0, %s119
      %s137 = sphi 0, %s137
      %s139 = sphi 0, %s137
      %s140 = sphi 0, %s139
      %s154 = sphi 0, %s140
      %s158 = sphi 0, %s158
      %s160 = sphi 0, %s158
      %s161 = sphi 0, %s160
      %s175 = sphi 0, %s161
      %s181 = sphi 0, %s183
      %s184 = sphi 0, %s181
      %s185 = sphi 0, %s184
      %s201 = sphi 0, %s185
    $region4: #{tpu_custom_call.1} parent=1 // loop_header_branch
      %22 = sbr.rel (%p20) target = $region8
    $region5: #{tpu_custom_call.1} parent=1 // loop_body
      %s24 = ssub.s32 %s19, 1
      %s25 = ssub.s32 %s19, 2
      %s26 = sadd.s32 %s19, 1
      %s27 = ssub.s32 %s19, %s26
      %p28 = scmp.eq.s32.totalorder %s27, 0
      %s30 = sadd.s32 %s29, 1
      %s31 = scalar_select %p28, %s29, %s30
      %p34 = pneg %p28
      %p35 = scmp.eq.s32.totalorder %s19, 1
      %p36 = por %p34, %p35
      %p37 = scmp.ne.s32.totalorder %s29, %s32
      %p38 = scmp.eq.s32.totalorder %s19, 0
      %p39 = por %p37, %p38
      %p40 = scmp.ne.s32.totalorder %s29, %s32
      %p41 = scmp.eq.s32.totalorder %s24, 1
      %p42 = por %p40, %p41
      %p43 = scmp.ne.s32.totalorder %s32, %s33
      %p44 = scmp.eq.s32.totalorder %s24, 0
      %p45 = por %p43, %p44
      %p46 = scmp.ne.s32.totalorder %s32, %s33
      %p47 = scmp.eq.s32.totalorder %s25, 1
      %p48 = por %p46, %p47
      %p50 = scmp.ne.s32.totalorder %s33, %s49
      %p51 = scmp.eq.s32.totalorder %s25, 0
      %p52 = por %p50, %p51
      %s54 = sadd.s32 %s53, 1
      %p57 = scmp.eq.s32.totalorder %s19, 1
      %p58 = scmp.ne.s32.totalorder %s53, %s55
      %p59 = scmp.eq.s32.totalorder %s19, 0
      %p60 = por %p58, %p59
      %p61 = scmp.ne.s32.totalorder %s53, %s55
      %p62 = scmp.eq.s32.totalorder %s24, 1
      %p63 = por %p61, %p62
      %p64 = scmp.ne.s32.totalorder %s55, %s56
      %p65 = scmp.eq.s32.totalorder %s24, 0
      %p66 = por %p64, %p65
      %p67 = scmp.ne.s32.totalorder %s55, %s56
      %p68 = scmp.eq.s32.totalorder %s25, 1
      %p69 = por %p67, %p68
      %p71 = scmp.ne.s32.totalorder %s56, %s70
      %p72 = scmp.eq.s32.totalorder %s25, 0
      %p73 = por %p71, %p72
      %s75 = sadd.s32 %s74, 1
      %p78 = scmp.eq.s32.totalorder %s19, 1
      %p79 = scmp.ne.s32.totalorder %s74, %s76
      %p80 = scmp.eq.s32.totalorder %s19, 0
      %p81 = por %p79, %p80
      %p82 = scmp.ne.s32.totalorder %s74, %s76
      %p83 = scmp.eq.s32.totalorder %s24, 1
      %p84 = por %p82, %p83
      %p85 = scmp.ne.s32.totalorder %s76, %s77
      %p86 = scmp.eq.s32.totalorder %s24, 0
      %p87 = por %p85, %p86
      %p88 = scmp.ne.s32.totalorder %s76, %s77
      %p89 = scmp.eq.s32.totalorder %s25, 1
      %p90 = por %p88, %p89
      %p92 = scmp.ne.s32.totalorder %s77, %s91
      %p93 = scmp.eq.s32.totalorder %s25, 0
      %p94 = por %p92, %p93
      %s96 = sadd.s32 %s95, 1
      %p99 = scmp.eq.s32.totalorder %s19, 1
      %p100 = scmp.ne.s32.totalorder %s95, %s97
      %p101 = scmp.eq.s32.totalorder %s19, 0
      %p102 = por %p100, %p101
      %p103 = scmp.ne.s32.totalorder %s95, %s97
      %p104 = scmp.eq.s32.totalorder %s24, 1
      %p105 = por %p103, %p104
      %p106 = scmp.ne.s32.totalorder %s97, %s98
      %p107 = scmp.eq.s32.totalorder %s24, 0
      %p108 = por %p106, %p107
      %p109 = scmp.ne.s32.totalorder %s97, %s98
      %p110 = scmp.eq.s32.totalorder %s25, 1
      %p111 = por %p109, %p110
      %p113 = scmp.ne.s32.totalorder %s98, %s112
      %p114 = scmp.eq.s32.totalorder %s25, 0
      %p115 = por %p113, %p114
      %s117 = sadd.s32 %s116, 1
      %p120 = scmp.eq.s32.totalorder %s19, 1
      %p121 = scmp.ne.s32.totalorder %s116, %s118
      %p122 = scmp.eq.s32.totalorder %s19, 0
      %p123 = por %p121, %p122
      %p124 = scmp.ne.s32.totalorder %s116, %s118
      %p125 = scmp.eq.s32.totalorder %s24, 1
      %p126 = por %p124, %p125
      %p127 = scmp.ne.s32.totalorder %s118, %s119
      %p128 = scmp.eq.s32.totalorder %s24, 0
      %p129 = por %p127, %p128
      %p130 = scmp.ne.s32.totalorder %s118, %s119
      %p131 = scmp.eq.s32.totalorder %s25, 1
      %p132 = por %p130, %p131
      %p134 = scmp.ne.s32.totalorder %s119, %s133
      %p135 = scmp.eq.s32.totalorder %s25, 0
      %p136 = por %p134, %p135
      %s138 = sadd.s32 %s137, 1
      %p141 = scmp.eq.s32.totalorder %s19, 1
      %p142 = scmp.ne.s32.totalorder %s137, %s139
      %p143 = scmp.eq.s32.totalorder %s19, 0
      %p144 = por %p142, %p143
      %p145 = scmp.ne.s32.totalorder %s137, %s139
      %p146 = scmp.eq.s32.totalorder %s24, 1
      %p147 = por %p145, %p146
      %p148 = scmp.ne.s32.totalorder %s139, %s140
      %p149 = scmp.eq.s32.totalorder %s24, 0
      %p150 = por %p148, %p149
      %p151 = scmp.ne.s32.totalorder %s139, %s140
      %p152 = scmp.eq.s32.totalorder %s25, 1
      %p153 = por %p151, %p152
      %p155 = scmp.ne.s32.totalorder %s140, %s154
      %p156 = scmp.eq.s32.totalorder %s25, 0
      %p157 = por %p155, %p156
      %s159 = sadd.s32 %s158, 1
      %p162 = scmp.eq.s32.totalorder %s19, 1
      %p163 = scmp.ne.s32.totalorder %s158, %s160
      %p164 = scmp.eq.s32.totalorder %s19, 0
      %p165 = por %p163, %p164
      %p166 = scmp.ne.s32.totalorder %s158, %s160
      %p167 = scmp.eq.s32.totalorder %s24, 1
      %p168 = por %p166, %p167
      %p169 = scmp.ne.s32.totalorder %s160, %s161
      %p170 = scmp.eq.s32.totalorder %s24, 0
      %p171 = por %p169, %p170
      %p172 = scmp.ne.s32.totalorder %s160, %s161
      %p173 = scmp.eq.s32.totalorder %s25, 1
      %p174 = por %p172, %p173
      %p176 = scmp.ne.s32.totalorder %s161, %s175
      %p177 = scmp.eq.s32.totalorder %s25, 0
      %p178 = por %p176, %p177
      %s179 = ssub.s32 %s19, %s26
      %p180 = scmp.eq.s32.totalorder %s179, 0
      %s182 = sadd.s32 %s181, 1
      %s183 = scalar_select %p180, %s181, %s182
      %p186 = pneg %p180
      %p187 = scmp.eq.s32.totalorder %s19, 1
      %p188 = por %p186, %p187
      %p189 = scmp.ne.s32.totalorder %s181, %s184
      %p190 = scmp.eq.s32.totalorder %s19, 0
      %p191 = por %p189, %p190
      %p192 = scmp.ne.s32.totalorder %s181, %s184
      %p193 = scmp.eq.s32.totalorder %s24, 1
      %p194 = por %p192, %p193
      %p195 = scmp.ne.s32.totalorder %s184, %s185
      %p196 = scmp.eq.s32.totalorder %s24, 0
      %p197 = por %p195, %p196
      %p198 = scmp.ne.s32.totalorder %s184, %s185
      %p199 = scmp.eq.s32.totalorder %s25, 1
      %p200 = por %p198, %p199
      %p202 = scmp.ne.s32.totalorder %s185, %s201
      %p203 = scmp.eq.s32.totalorder %s25, 0
      %p204 = por %p202, %p203
      %p205 = scmp.le.s32.totalorder 1, %s19
      %p206 = scmp.lt.s32.totalorder %s19, 3
      %p207 = pnand %p205, %p206
      %p208 = pneg %p207
      // Predicated region
      $region9: #{tpu_custom_call.1} parent=5 // pred_check
        _
      $region10: #{tpu_custom_call.1} parent=5 // pred_check_branch
        %210 = sbr.rel (%p207) target = $region12
      $region11: #{tpu_custom_call.1} parent=5 // pred_region
        %s211 = ssub.s32 %s19, 1
        // Predicated region
        $region13: #{tpu_custom_call.1} parent=11 // pred_check
          %p212 = pneg %p66
        $region14: #{tpu_custom_call.1} parent=11 // pred_check_branch
          %214 = sbr.rel (%p212) target = $region16
        $region15: #{tpu_custom_call.1} parent=11 // pred_region
          _
        $region16: #{tpu_custom_call.1} parent=11 // pred_fallthru
          _
        // Predicated region
        $region17: #{tpu_custom_call.1} parent=11 // pred_check
          %p215 = pneg %p87
        $region18: #{tpu_custom_call.1} parent=11 // pred_check_branch
          %217 = sbr.rel (%p215) target = $region20
        $region19: #{tpu_custom_call.1} parent=11 // pred_region
          _
        $region20: #{tpu_custom_call.1} parent=11 // pred_fallthru
          _
        // Predicated region
        $region21: #{tpu_custom_call.1} parent=11 // pred_check
          %p218 = pneg %p108
        $region22: #{tpu_custom_call.1} parent=11 // pred_check_branch
          %220 = sbr.rel (%p218) target = $region24
        $region23: #{tpu_custom_call.1} parent=11 // pred_region
          %s222 = ssub.s32 2048, 2048
          %223 = vsyncadd [#allocation4], %s222
          %s224 = sshll.u32 [#allocation3], 4
          %s225 = int_to_ptr.vmem [resolvable:$true] %s224
          %230 = dma.hbm_to_vmem [thread:$0]  %s3, 2048, %s225, [#allocation4], 128, 128, 8
        $region24: #{tpu_custom_call.1} parent=11 // pred_fallthru
          _
        // Predicated region
        $region25: #{tpu_custom_call.1} parent=11 // pred_check
          %p231 = pneg %p129
        $region26: #{tpu_custom_call.1} parent=11 // pred_check_branch
          %233 = sbr.rel (%p231) target = $region28
        $region27: #{tpu_custom_call.1} parent=11 // pred_region
          _
        $region28: #{tpu_custom_call.1} parent=11 // pred_fallthru
          _
        // Predicated region
        $region29: #{tpu_custom_call.1} parent=11 // pred_check
          %p234 = pneg %p150
        $region30: #{tpu_custom_call.1} parent=11 // pred_check_branch
          %236 = sbr.rel (%p234) target = $region32
        $region31: #{tpu_custom_call.1} parent=11 // pred_region
          _
        $region32: #{tpu_custom_call.1} parent=11 // pred_fallthru
          _
        // Predicated region
        $region33: #{tpu_custom_call.1} parent=11 // pred_check
          %p237 = pneg %p171
        $region34: #{tpu_custom_call.1} parent=11 // pred_check_branch
          %239 = sbr.rel (%p237) target = $region36
        $region35: #{tpu_custom_call.1} parent=11 // pred_region
          _
        $region36: #{tpu_custom_call.1} parent=11 // pred_fallthru
          _
      $region12: #{tpu_custom_call.1} parent=5 // pred_fallthru
        _
      %p240 = scmp.lt.s32.totalorder %s19, 2
      // Predicated region
      $region37: #{tpu_custom_call.1} parent=5 // pred_check
        %p241 = pneg %p240
      $region38: #{tpu_custom_call.1} parent=5 // pred_check_branch
        %243 = sbr.rel (%p241) target = $region40
      $region39: #{tpu_custom_call.1} parent=5 // pred_region
        // Predicated region
        $region41: #{tpu_custom_call.1} parent=39 // pred_check
          %p244 = pneg %p39
        $region42: #{tpu_custom_call.1} parent=39 // pred_check_branch
          %246 = sbr.rel (%p244) target = $region44
        $region43: #{tpu_custom_call.1} parent=39 // pred_region
          %p247 = scmp.lt.s32.totalorder %s19, 1
          %s248 = scalar_select %p247, %s19, 1
          %s249 = smul.addr %s248, 8
          %s250 = scalar_lea.vmem %s0, %s249
        $region44: #{tpu_custom_call.1} parent=39 // pred_fallthru
          _
      $region40: #{tpu_custom_call.1} parent=5 // pred_fallthru
        _
      %p251 = scmp.le.s32.totalorder 1, %s19
      %p252 = scmp.lt.s32.totalorder %s19, 3
      %p253 = pnand %p251, %p252
      %p254 = pneg %p253
      // Predicated region
      $region45: #{tpu_custom_call.1} parent=5 // pred_check
        _
      $region46: #{tpu_custom_call.1} parent=5 // pred_check_branch
        %256 = sbr.rel (%p253) target = $region48
      $region47: #{tpu_custom_call.1} parent=5 // pred_region
        %s257 = ssub.s32 %s19, 1
        // Predicated region
        $region49: #{tpu_custom_call.1} parent=47 // pred_check
          %p258 = pneg %p108
        $region50: #{tpu_custom_call.1} parent=47 // pred_check_branch
          %260 = sbr.rel (%p258) target = $region52
        $region51: #{tpu_custom_call.1} parent=47 // pred_region
          %261 = dma.done [#allocation4], 2048
        $region52: #{tpu_custom_call.1} parent=47 // pred_fallthru
          _
        %p262 = scmp.lt.s32.totalorder %s24, 1
        %s263 = scalar_select %p262, %s24, 1
        %s264 = smul.addr %s263, 8
        %s265 = scalar_lea.vmem %s0, %s264
        %p266 = pneg %p45
        %p267 = pneg %p42
        %p268 = pneg %p66
        %p269 = pneg %p63
        %p270 = pneg %p87
        %p271 = pneg %p84
        %p272 = pneg %p108
        %p273 = pneg %p105
        %p274 = pneg %p129
        %p275 = pneg %p126
        %p276 = pneg %p150
        %p277 = pneg %p147
        %p278 = pneg %p171
        %p279 = pneg %p168
        %p280 = pneg %p197
        %p281 = pneg %p194
        %s282 = sand.u32 %s184, 1
        %s283 = scalar_lea.sflag [#allocation5], %s282
        %s284 = sand.u32 %s184, 1
        %s285 = smul.addr %s284, 8
        %s286 = scalar_lea.vmem [#allocation6], %s285
        %p287 = scmp.lt.s32.totalorder %s24, 1
        %s288 = scalar_select %p287, %s24, 1
        %s289 = smul.addr %s288, 8
        %s290 = scalar_lea.vmem %s0, %s289
        %v291 = vld [vmem:[%s290] sm:$0xff]
        %v292 = vld [vmem:[%s1] sm:$0x1]
        %294 = vset.pattern.permute.xlu0 0
        %295 = vperm.xlu0 %294, %v291
        %v296 = vpop.permute.xlu0 %295
        %v299 = vlaneseq
        %v300 = vshrl.u32 %v299, 7
        %v301 = vsub.s32 0, %v300
        %v302 = vrot.slane %v292, %v301
        %v304 = vmul.f32 %v296, %v302
        %v305 = vld [vmem:[%s2] sm:$0x1]
        %v307 = vlaneseq
        %v308 = vshrl.u32 %v307, 7
        %v309 = vsub.s32 0, %v308
        %v310 = vrot.slane %v305, %v309
        %v312 = vadd.f32 %v304, %v310
        %v313 = vmax.f32 %v312, 0.0
        %v314 = vld [vmem:[#allocation3] sm:$0xff]
        %v315 = vld [vmem:[#allocation3 + $0x8] sm:$0xff]
        %v316 = vld [vmem:[#allocation3 + $0x10] sm:$0xff]
        %v317 = vld [vmem:[#allocation3 + $0x18] sm:$0xff]
        %v318 = vld [vmem:[#allocation3 + $0x20] sm:$0xff]
        %v319 = vld [vmem:[#allocation3 + $0x28] sm:$0xff]
        %v320 = vld [vmem:[#allocation3 + $0x30] sm:$0xff]
        %v321 = vld [vmem:[#allocation3 + $0x38] sm:$0xff]
        %v322 = vld [vmem:[#allocation3 + $0x40] sm:$0xff]
        %v323 = vld [vmem:[#allocation3 + $0x48] sm:$0xff]
        %v324 = vld [vmem:[#allocation3 + $0x50] sm:$0xff]
        %v325 = vld [vmem:[#allocation3 + $0x58] sm:$0xff]
        %v326 = vld [vmem:[#allocation3 + $0x60] sm:$0xff]
        %v327 = vld [vmem:[#allocation3 + $0x68] sm:$0xff]
        %v328 = vld [vmem:[#allocation3 + $0x70] sm:$0xff]
        %v329 = vld [vmem:[#allocation3 + $0x78] sm:$0xff]
        %v330 = vld [vmem:[%s4] sm:$0x1]
        %v332 = vlaneseq
        %v333 = vshrl.u32 %v332, 7
        %v334 = vsub.s32 0, %v333
        %v335 = vrot.slane %v330, %v334
        %337 = vmatprep.subr.mxu0 0.0
        %338 = vmatpush1.msra.mxu0 %v314
        %339 = vmatprep.subr.mxu0 0.0
        %340 = vmatpush1.msra.mxu0 %v315
        %341 = vmatprep.subr.mxu0 0.0
        %342 = vmatpush1.msra.mxu0 %v316
        %343 = vmatprep.subr.mxu0 0.0
        %344 = vmatpush1.msra.mxu0 %v317
        %345 = vmatprep.subr.mxu0 0.0
        %346 = vmatpush1.msra.mxu0 %v318
        %347 = vmatprep.subr.mxu0 0.0
        %348 = vmatpush1.msra.mxu0 %v319
        %349 = vmatprep.subr.mxu0 0.0
        %350 = vmatpush1.msra.mxu0 %v320
        %351 = vmatprep.subr.mxu0 0.0
        %352 = vmatpush1.msra.mxu0 %v321
        %353 = vmatprep.subr.mxu0 0.0
        %354 = vmatpush1.msra.mxu0 %v322
        %355 = vmatprep.subr.mxu0 0.0
        %356 = vmatpush1.msra.mxu0 %v323
        %357 = vmatprep.subr.mxu0 0.0
        %358 = vmatpush1.msra.mxu0 %v324
        %359 = vmatprep.subr.mxu0 0.0
        %360 = vmatpush1.msra.mxu0 %v325
        %361 = vmatprep.subr.mxu0 0.0
        %362 = vmatpush1.msra.mxu0 %v326
        %363 = vmatprep.subr.mxu0 0.0
        %364 = vmatpush1.msra.mxu0 %v327
        %365 = vmatprep.subr.mxu0 0.0
        %366 = vmatpush1.msra.mxu0 %v328
        %367 = vmatprep.subr.mxu0 0.0
        %368 = vmatpush1.msra.mxu0 %v329
        %369 = vmatprep.subr.mxu0 0.0
        %370 = vmatpush1.msra.mxu0 0.0
        %371 = vmatprep.subr.mxu0 0.0
        %372 = vmatpush1.msra.mxu0 0.0
        %373 = vmatprep.subr.mxu0 0.0
        %374 = vmatpush1.msra.mxu0 0.0
        %375 = vmatprep.subr.mxu0 0.0
        %376 = vmatpush1.msra.mxu0 0.0
        %377 = vmatprep.subr.mxu0 0.0
        %378 = vmatpush1.msra.mxu0 0.0
        %379 = vmatprep.subr.mxu0 0.0
        %380 = vmatpush1.msra.mxu0 0.0
        %381 = vmatprep.subr.mxu0 0.0
        %382 = vmatpush1.msra.mxu0 0.0
        %383 = vmatprep.subr.mxu0 0.0
        %384 = vmatpush1.msra.mxu0 0.0
        %385 = vmatprep.subr.mxu0 0.0
        %386 = vmatpush1.msra.mxu0 0.0
        %387 = vmatprep.subr.mxu0 0.0
        %388 = vmatpush1.msra.mxu0 0.0
        %389 = vmatprep.subr.mxu0 0.0
        %390 = vmatpush1.msra.mxu0 0.0
        %391 = vmatprep.subr.mxu0 0.0
        %392 = vmatpush1.msra.mxu0 0.0
        %393 = vmatprep.subr.mxu0 0.0
        %394 = vmatpush1.msra.mxu0 0.0
        %395 = vmatprep.subr.mxu0 0.0
        %396 = vmatpush1.msra.mxu0 0.0
        %397 = vmatprep.subr.mxu0 0.0
        %398 = vmatpush1.msra.mxu0 0.0
        %399 = vmatprep.subr.mxu0 0.0
        %400 = vmatpush1.msra.mxu0 0.0
        %401 = vmatprep.mubr.f32.mxu0 0.0
        %402 = vmatmul.mubr.f32.gmra.mrb[0].mxu0 %v313
        %v403 = vpop.f32.mrb[0].mxu0
        %v404 = vadd.f32 %v335, %v403
        %v405 = vpop.f32.mrb[0].mxu0
        %406 = vdwg.mxu0
        %v407 = vmax.f32 %v404, 0.0
        %v408 = vld [vmem:[%s5] sm:$0x1]
        %v410 = vlaneseq
        %v411 = vshrl.u32 %v410, 7
        %v412 = vsub.s32 0, %v411
        %v413 = vrot.slane %v408, %v412
        %v415 = vmul.f32 %v407, %v413
        %416 = vadd.xlane.f32.xlu0 %v415
        %v417 = vpop.xlane.xlu0 %416
        %v418 = vld [vmem:[#allocation2] sm:$0x1]
        %v420 = vlaneseq
        %v421 = vshrl.u32 %v420, 7
        %v422 = vsub.s32 0, %v421
        %v423 = vrot.slane %v418, %v422
        %v425 = vadd.f32 %v417, %v423
        %427 = vset.pattern.permute.xlu0 0
        %428 = vperm.xlu0 %427, %v425
        %v429 = vpop.permute.xlu0 %428
        %431 = vst [vmem:[%s286] sm:$0xff] %v429
        %s432 = sand.u32 %s184, 1
        %s433 = scalar_lea.sflag [#allocation5], %s432
        %s434 = sand.u32 %s184, 1
        %s435 = smul.addr %s434, 8
        %s436 = scalar_lea.vmem [#allocation6], %s435
        // Predicated region
        $region53: #{tpu_custom_call.1} parent=47 // pred_check
          %p437 = pneg %p194
        $region54: #{tpu_custom_call.1} parent=47 // pred_check_branch
          %439 = sbr.rel (%p437) target = $region56
        $region55: #{tpu_custom_call.1} parent=47 // pred_region
          %s441 = ssub.s32 128, 128
          %442 = vsyncadd %s433, %s441
          %s443 = smul.addr %s24, 128
          %s444 = scalar_lea.hbm %s7, %s443
          %s446 = sshll.u32 %s436, 4
          %s447 = int_to_ptr.vmem [resolvable:$true] %s446
          %449 = dma.vmem_to_hbm [thread:$0]  %s447, 128, %s444, %s433
        $region56: #{tpu_custom_call.1} parent=47 // pred_fallthru
          _
      $region48: #{tpu_custom_call.1} parent=5 // pred_fallthru
        _
      %p450 = scmp.le.s32.totalorder 2, %s19
      // Predicated region
      $region57: #{tpu_custom_call.1} parent=5 // pred_check
        %p451 = pneg %p450
      $region58: #{tpu_custom_call.1} parent=5 // pred_check_branch
        %453 = sbr.rel (%p451) target = $region60
      $region59: #{tpu_custom_call.1} parent=5 // pred_region
        %s454 = ssub.s32 %s19, 2
        // Predicated region
        $region61: #{tpu_custom_call.1} parent=59 // pred_check
          %p455 = pneg %p200
        $region62: #{tpu_custom_call.1} parent=59 // pred_check_branch
          %457 = sbr.rel (%p455) target = $region64
        $region63: #{tpu_custom_call.1} parent=59 // pred_region
          %s458 = sand.u32 %s185, 1
          %s459 = scalar_lea.sflag [#allocation5], %s458
          %s460 = sand.u32 %s185, 1
          %s461 = smul.addr %s460, 8
          %s462 = scalar_lea.vmem [#allocation6], %s461
          %463 = dma.done %s459, 128
        $region64: #{tpu_custom_call.1} parent=59 // pred_fallthru
          _
      $region60: #{tpu_custom_call.1} parent=5 // pred_fallthru
        _
    $region6: #{tpu_custom_call.1} parent=1 // loop_footer
      %s23 = sadd.s32 1, %s19
    $region7: #{tpu_custom_call.1} parent=1 // loop_footer_branch
      %18 = sbr.rel target = $region3
    $region8: #{tpu_custom_call.1} parent=1 // loop_exit
      _
    %464 = vsyncpa [#allocation4], 1
    %s465 = scalar_lea.sflag [#allocation4], 1
    %466 = vsyncpa %s465, 1
    %467 = vsyncpa [#allocation5], 1
    %s468 = scalar_lea.sflag [#allocation5], 1
    %469 = vsyncpa %s468, 1

</llo_original>
